<compile_context>
chip_gen: v7x
topology: tpu7x:2x2x1
jax: 0.10.0
libtpu: 0.0.40
codegen_flags: <defaults>
</compile_context>

<pallas_src>
import jax
import jax.numpy as jnp
from jax import lax
from jax.experimental import pallas as pl
from jax.experimental.pallas import tpu as pltpu

_CHUNK = 1024  # rows per in-kernel compute chunk (bounds intermediate VMEM)


def final_expert_kernel(x_ref, w1_ref, b1_ref, w2_ref, b2_ref, w3_ref, b3_ref, o_ref):
    tb = x_ref.shape[0]
    ch = min(tb, _CHUNK)
    if tb % ch != 0:       # odd / small tile -> single monolithic chunk
        ch = tb
    n_chunks = tb // ch

    # Resident weights/biases (constant index_map -> loaded once per tile).
    w1 = w1_ref[...]
    b1 = b1_ref[...]
    w2 = w2_ref[...]
    b2 = b2_ref[...]
    w3 = w3_ref[...]
    b3 = b3_ref[...]

    def run_chunk(row):
        xb = x_ref[pl.ds(row, ch), :]                                   # (ch, 64)
        h = jnp.dot(xb, w1, preferred_element_type=jnp.float32) + b1    # (ch, 32)
        h = jnp.maximum(h, 0.0)
        h = jnp.dot(h, w2, preferred_element_type=jnp.float32) + b2     # (ch, 16)
        h = jnp.maximum(h, 0.0)
        h = jnp.dot(h, w3, preferred_element_type=jnp.float32) + b3     # (ch, 2)
        h = jnp.maximum(h, 0.0)
        o_ref[pl.ds(row, ch), :] = h.astype(o_ref.dtype)

    if n_chunks == 1:
        run_chunk(0)
    else:
        def body(c, carry):
            run_chunk(pl.multiple_of(c * ch, ch))
            return carry

        lax.fori_loop(0, n_chunks, body, 0)


def prepare_params(params):
    """One-time relayout: PyTorch (out,in) weights -> (in,out); biases -> (1,out).

    Call once at parameter-load time; the hot path then emits no transposes.
    """
    return (
        jnp.asarray(params["w1"]).T,           # (64, 32)
        jnp.asarray(params["b1"])[None, :],    # (1, 32)
        jnp.asarray(params["w2"]).T,           # (32, 16)
        jnp.asarray(params["b2"])[None, :],    # (1, 16)
        jnp.asarray(params["w3"]).T,           # (16, 2)
        jnp.asarray(params["b3"])[None, :],    # (1, 2)
    )


def _pick_tile(b, tb_cap):
    """Batch tile: big enough to amortize per-step overhead, small enough for
    VMEM, and <= ~B/2 so large batches always give >= 2 grid steps (v7x)."""
    tb_cap = max(_CHUNK, (tb_cap // _CHUNK) * _CHUNK)
    if b <= 2 * _CHUNK:
        return b                                   # single block, full-dim specs
    tb = min(tb_cap, (b // 2 // _CHUNK) * _CHUNK)  # >= 2 grid steps
    return max(_CHUNK, tb)


def final_expert(x, kernel_params, tb=8192):
    """x: (B, 64) float32. kernel_params: output of prepare_params()."""
    B = x.shape[0]
    TB = _pick_tile(B, tb)
    grid = pl.cdiv(B, TB)          # ragged last block handled by Pallas masking
    w1, b1, w2, b2, w3, b3 = kernel_params

    return pl.pallas_call(
        final_expert_kernel,
        out_shape=jax.ShapeDtypeStruct((B, 2), x.dtype),
        grid=(grid,),
        in_specs=[
            pl.BlockSpec((TB, 64), lambda i: (i, 0)),   # streamed activations
            pl.BlockSpec((64, 32), lambda i: (0, 0)),   # resident weights / biases
            pl.BlockSpec((1, 32), lambda i: (0, 0)),
            pl.BlockSpec((32, 16), lambda i: (0, 0)),
            pl.BlockSpec((1, 16), lambda i: (0, 0)),
            pl.BlockSpec((16, 2), lambda i: (0, 0)),
            pl.BlockSpec((1, 2), lambda i: (0, 0)),
        ],
        out_specs=pl.BlockSpec((TB, 2), lambda i: (i, 0)),
        compiler_params=pltpu.CompilerParams(
            dimension_semantics=("parallel",),
            vmem_limit_bytes=48 * 1024 * 1024,  # > v5e 16 MiB default, < v7x 64 MiB physical
        ),
    )(x, w1, b1, w2, b2, w3, b3)


def init_params(key):
    """Deterministic PyTorch-shaped parameter init (uniform, like nn.Linear)."""
    ks = jax.random.split(key, 6)

    def linear(kw, kb, out_f, in_f):
        bound = 1.0 / (in_f ** 0.5)
        w = jax.random.uniform(kw, (out_f, in_f), jnp.float32, -bound, bound)
        b = jax.random.uniform(kb, (out_f,), jnp.float32, -bound, bound)
        return w, b

    w1, b1 = linear(ks[0], ks[1], 32, 64)
    w2, b2 = linear(ks[2], ks[3], 16, 32)
    w3, b3 = linear(ks[4], ks[5], 2, 16)
    return {"w1": w1, "b1": b1, "w2": w2, "b2": b2, "w3": w3, "b3": b3}


def reference(x, p):
    h = jnp.maximum(x @ p["w1"].T + p["b1"], 0.0)
    h = jnp.maximum(h @ p["w2"].T + p["b2"], 0.0)
    h = jnp.maximum(h @ p["w3"].T + p["b3"], 0.0)
    return h


if __name__ == "__main__":
    key = jax.random.PRNGKey(0)
    kx1, kx2, kx3, kp = jax.random.split(key, 4)
    params = init_params(kp)
    kparams = prepare_params(params)   # one-time relayout, outside the hot path

    cases = (
        ("tiny", kx1, 8),          # single grid step, single chunk
        ("ragged", kx2, 37),       # non-multiple-of-8 batch, full-dim block
        ("multi-block", kx3, 5000),  # grid=3 with masked partial last block + chunked inner loop
    )
    for name, kx, B in cases:
        x = jax.random.normal(kx, (B, 64), jnp.float32)
        out = jax.block_until_ready(final_expert(x, kparams))
        ref = reference(x, params)
        assert out.shape == (B, 2), (name, out.shape)
        assert jnp.allclose(out, ref, atol=1e-4, rtol=1e-4), f"mismatch vs reference ({name}, B={B})"

    print("KERNEL_OK")
</pallas_src>

<mosaic_0001>
module attributes {stable_mosaic.version = 11 : i64} {
  func.func @final_expert_kernel(%arg0: i32, %arg1: memref<8x64xf32, #tpu.memory_space<vmem>>, %arg2: memref<64x32xf32, #tpu.memory_space<vmem>>, %arg3: memref<1x32xf32, #tpu.memory_space<vmem>>, %arg4: memref<32x16xf32, #tpu.memory_space<vmem>>, %arg5: memref<1x16xf32, #tpu.memory_space<vmem>>, %arg6: memref<16x2xf32, #tpu.memory_space<vmem>>, %arg7: memref<1x2xf32, #tpu.memory_space<vmem>>, %arg8: memref<8x2xf32, #tpu.memory_space<vmem>>) attributes {dimension_semantics = [#tpu.dimension_semantics<parallel>], iteration_bounds = array<i64: 1>, scalar_prefetch = 0 : i64, scratch_operands = 0 : i64, tpu.core_type = #tpu.core_type<tc>, window_params = [{transform_indices = @transform_0, window_bounds = array<i64: 8, 64>}, {pipeline_mode = #tpu.pipeline_mode<synchronous>, transform_indices = @transform_1, window_bounds = array<i64: 64, 32>}, {pipeline_mode = #tpu.pipeline_mode<synchronous>, transform_indices = @transform_2, window_bounds = array<i64: 1, 32>}, {pipeline_mode = #tpu.pipeline_mode<synchronous>, transform_indices = @transform_3, window_bounds = array<i64: 32, 16>}, {pipeline_mode = #tpu.pipeline_mode<synchronous>, transform_indices = @transform_4, window_bounds = array<i64: 1, 16>}, {pipeline_mode = #tpu.pipeline_mode<synchronous>, transform_indices = @transform_5, window_bounds = array<i64: 16, 2>}, {pipeline_mode = #tpu.pipeline_mode<synchronous>, transform_indices = @transform_6, window_bounds = array<i64: 1, 2>}, {transform_indices = @transform_7, window_bounds = array<i64: 8, 2>}]} {
    %c0 = arith.constant 0 : index
    %c0_0 = arith.constant 0 : index
    %0 = vector.load %arg2[%c0, %c0_0] : memref<64x32xf32, #tpu.memory_space<vmem>>, vector<64x32xf32>
    %c0_1 = arith.constant 0 : index
    %c0_2 = arith.constant 0 : index
    %1 = vector.load %arg3[%c0_1, %c0_2] : memref<1x32xf32, #tpu.memory_space<vmem>>, vector<1x32xf32>
    %c0_3 = arith.constant 0 : index
    %c0_4 = arith.constant 0 : index
    %2 = vector.load %arg4[%c0_3, %c0_4] : memref<32x16xf32, #tpu.memory_space<vmem>>, vector<32x16xf32>
    %c0_5 = arith.constant 0 : index
    %c0_6 = arith.constant 0 : index
    %3 = vector.load %arg5[%c0_5, %c0_6] : memref<1x16xf32, #tpu.memory_space<vmem>>, vector<1x16xf32>
    %c0_7 = arith.constant 0 : index
    %c0_8 = arith.constant 0 : index
    %4 = vector.load %arg6[%c0_7, %c0_8] : memref<16x2xf32, #tpu.memory_space<vmem>>, vector<16x2xf32>
    %c0_9 = arith.constant 0 : index
    %c0_10 = arith.constant 0 : index
    %5 = vector.load %arg7[%c0_9, %c0_10] : memref<1x2xf32, #tpu.memory_space<vmem>>, vector<1x2xf32>
    %c0_11 = arith.constant 0 : index
    %c0_12 = arith.constant 0 : index
    %6 = vector.load %arg1[%c0_11, %c0_12] : memref<8x64xf32, #tpu.memory_space<vmem>>, vector<8x64xf32>
    %cst = arith.constant dense<0.000000e+00> : vector<8x32xf32>
    %7 = tpu.matmul %6, %0, %cst {dimension_numbers = #tpu.dot_dimension_numbers<[1], [0], [0], [1], [0, 0, 1, 1], [], []>} : vector<8x64xf32>, vector<64x32xf32>, vector<8x32xf32> -> vector<8x32xf32>
    %8 = vector.broadcast %1 : vector<1x32xf32> to vector<8x32xf32>
    %9 = arith.addf %7, %8 : vector<8x32xf32>
    %cst_13 = arith.constant 0.000000e+00 : f32
    %10 = vector.broadcast %cst_13 : f32 to vector<8x32xf32>
    %11 = arith.maximumf %9, %10 : vector<8x32xf32>
    %cst_14 = arith.constant dense<0.000000e+00> : vector<8x16xf32>
    %12 = tpu.matmul %11, %2, %cst_14 {dimension_numbers = #tpu.dot_dimension_numbers<[1], [0], [0], [1], [0, 0, 1, 1], [], []>} : vector<8x32xf32>, vector<32x16xf32>, vector<8x16xf32> -> vector<8x16xf32>
    %13 = vector.broadcast %3 : vector<1x16xf32> to vector<8x16xf32>
    %14 = arith.addf %12, %13 : vector<8x16xf32>
    %cst_15 = arith.constant 0.000000e+00 : f32
    %15 = vector.broadcast %cst_15 : f32 to vector<8x16xf32>
    %16 = arith.maximumf %14, %15 : vector<8x16xf32>
    %cst_16 = arith.constant dense<0.000000e+00> : vector<8x2xf32>
    %17 = tpu.matmul %16, %4, %cst_16 {dimension_numbers = #tpu.dot_dimension_numbers<[1], [0], [0], [1], [0, 0, 1, 1], [], []>} : vector<8x16xf32>, vector<16x2xf32>, vector<8x2xf32> -> vector<8x2xf32>
    %18 = vector.broadcast %5 : vector<1x2xf32> to vector<8x2xf32>
    %19 = arith.addf %17, %18 : vector<8x2xf32>
    %cst_17 = arith.constant 0.000000e+00 : f32
    %20 = vector.broadcast %cst_17 : f32 to vector<8x2xf32>
    %21 = arith.maximumf %19, %20 : vector<8x2xf32>
    %c0_18 = arith.constant 0 : index
    %c0_19 = arith.constant 0 : index
    %22 = vector.load %arg8[%c0_18, %c0_19] : memref<8x2xf32, #tpu.memory_space<vmem>>, vector<8x2xf32>
    tpu.vector_store %arg8[%c0_18, %c0_19], %21 {strides = array<i32>} : memref<8x2xf32, #tpu.memory_space<vmem>>, vector<8x2xf32>,
    return
  }
  func.func @transform_0(%arg0: i32) -> (i32, i32) {
    %c0_i32 = arith.constant 0 : i32
    %c0_i32_0 = arith.constant 0 : i32
    return %arg0, %c0_i32 : i32, i32
  }
  func.func @transform_1(%arg0: i32) -> (i32, i32) {
    %c0_i32 = arith.constant 0 : i32
    %c0_i32_0 = arith.constant 0 : i32
    %c0_i32_1 = arith.constant 0 : i32
    return %c0_i32, %c0_i32_0 : i32, i32
  }
  func.func @transform_2(%arg0: i32) -> (i32, i32) {
    %c0_i32 = arith.constant 0 : i32
    %c0_i32_0 = arith.constant 0 : i32
    %c0_i32_1 = arith.constant 0 : i32
    return %c0_i32, %c0_i32_0 : i32, i32
  }
  func.func @transform_3(%arg0: i32) -> (i32, i32) {
    %c0_i32 = arith.constant 0 : i32
    %c0_i32_0 = arith.constant 0 : i32
    %c0_i32_1 = arith.constant 0 : i32
    return %c0_i32, %c0_i32_0 : i32, i32
  }
  func.func @transform_4(%arg0: i32) -> (i32, i32) {
    %c0_i32 = arith.constant 0 : i32
    %c0_i32_0 = arith.constant 0 : i32
    %c0_i32_1 = arith.constant 0 : i32
    return %c0_i32, %c0_i32_0 : i32, i32
  }
  func.func @transform_5(%arg0: i32) -> (i32, i32) {
    %c0_i32 = arith.constant 0 : i32
    %c0_i32_0 = arith.constant 0 : i32
    %c0_i32_1 = arith.constant 0 : i32
    return %c0_i32, %c0_i32_0 : i32, i32
  }
  func.func @transform_6(%arg0: i32) -> (i32, i32) {
    %c0_i32 = arith.constant 0 : i32
    %c0_i32_0 = arith.constant 0 : i32
    %c0_i32_1 = arith.constant 0 : i32
    return %c0_i32, %c0_i32_0 : i32, i32
  }
  func.func @transform_7(%arg0: i32) -> (i32, i32) {
    %c0_i32 = arith.constant 0 : i32
    %c0_i32_0 = arith.constant 0 : i32
    return %arg0, %c0_i32 : i32, i32
  }
}

</mosaic_0001>

<llo_original>
// kernel: tpu_custom_call.1
$region0: #{tpu_custom_call.1}
  #allocation0 [shape = 'u32[]', space=smem, size = 0x4, offset = 0x4, fixed_abs, tag = 'smem constant byte address 0x4 - core index']
  #allocation1 [shape = 'u32[144,128]{1,0:T(1,128)}', space=vmem, size = 0x12000, scoped, tag = 'internal scratch']
  %s0 = inlined_call_operand.vmem [shape: f32[8,64], index: 0, kind: input, shape index: {}]
  %s1 = inlined_call_operand.vmem [shape: f32[64,32], index: 1, kind: input, shape index: {}]
  %s2 = inlined_call_operand.vmem [shape: f32[1,32], index: 2, kind: input, shape index: {}]
  %s3 = inlined_call_operand.vmem [shape: f32[32,16], index: 3, kind: input, shape index: {}]
  %s4 = inlined_call_operand.vmem [shape: f32[1,16], index: 4, kind: input, shape index: {}]
  %s5 = inlined_call_operand.vmem [shape: f32[16,2], index: 5, kind: input, shape index: {}]
  %s6 = inlined_call_operand.vmem [shape: f32[1,2], index: 6, kind: input, shape index: {}]
  %s7 = inlined_call_operand.vmem [shape: f32[8,2], index: 7, kind: output, shape index: {}]
  %s8 = sld [smem:[#allocation0]]
  $region38: #{tpu_custom_call.1} parent=0
    _
  %s10 = ssub.s32 1, %s8
  %s11 = scalar_select 0, %s10, %s8
  // Predicated region
  $region2: #{tpu_custom_call.1} parent=0 // pred_check
    _
  $region3: #{tpu_custom_call.1} parent=0 // pred_check_branch
    %13 = sbr.rel (0) target = $region5
  $region4: #{tpu_custom_call.1} parent=0 // pred_region
    _
  $region5: #{tpu_custom_call.1} parent=0 // pred_fallthru
    _
  // Predicated region
  $region6: #{tpu_custom_call.1} parent=0 // pred_check
    _
  $region7: #{tpu_custom_call.1} parent=0 // pred_check_branch
    %15 = sbr.rel (0) target = $region9
  $region8: #{tpu_custom_call.1} parent=0 // pred_region
    _
  $region9: #{tpu_custom_call.1} parent=0 // pred_fallthru
    _
  // Predicated region
  $region10: #{tpu_custom_call.1} parent=0 // pred_check
    _
  $region11: #{tpu_custom_call.1} parent=0 // pred_check_branch
    %17 = sbr.rel (0) target = $region13
  $region12: #{tpu_custom_call.1} parent=0 // pred_region
    _
  $region13: #{tpu_custom_call.1} parent=0 // pred_fallthru
    _
  // Predicated region
  $region14: #{tpu_custom_call.1} parent=0 // pred_check
    _
  $region15: #{tpu_custom_call.1} parent=0 // pred_check_branch
    %19 = sbr.rel (0) target = $region17
  $region16: #{tpu_custom_call.1} parent=0 // pred_region
    _
  $region17: #{tpu_custom_call.1} parent=0 // pred_fallthru
    _
  // Predicated region
  $region18: #{tpu_custom_call.1} parent=0 // pred_check
    _
  $region19: #{tpu_custom_call.1} parent=0 // pred_check_branch
    %21 = sbr.rel (0) target = $region21
  $region20: #{tpu_custom_call.1} parent=0 // pred_region
    _
  $region21: #{tpu_custom_call.1} parent=0 // pred_fallthru
    _
  // Predicated region
  $region22: #{tpu_custom_call.1} parent=0 // pred_check
    _
  $region23: #{tpu_custom_call.1} parent=0 // pred_check_branch
    %23 = sbr.rel (0) target = $region25
  $region24: #{tpu_custom_call.1} parent=0 // pred_region
    _
  $region25: #{tpu_custom_call.1} parent=0 // pred_fallthru
    _
  // Predicated region
  $region26: #{tpu_custom_call.1} parent=0 // pred_check
    _
  $region27: #{tpu_custom_call.1} parent=0 // pred_check_branch
    %25 = sbr.rel (0) target = $region29
  $region28: #{tpu_custom_call.1} parent=0 // pred_region
    _
  $region29: #{tpu_custom_call.1} parent=0 // pred_fallthru
    _
  %v26 = vld [vmem:[%s1] sm:$0xff]
  %v27 = vld [vmem:[%s1 + $0x8] sm:$0xff]
  %v28 = vld [vmem:[%s1 + $0x10] sm:$0xff]
  %v29 = vld [vmem:[%s1 + $0x18] sm:$0xff]
  %v30 = vld [vmem:[%s1 + $0x20] sm:$0xff]
  %v31 = vld [vmem:[%s1 + $0x28] sm:$0xff]
  %v32 = vld [vmem:[%s1 + $0x30] sm:$0xff]
  %v33 = vld [vmem:[%s1 + $0x38] sm:$0xff]
  %v34 = vld [vmem:[%s2] sm:$0x1]
  %v35 = vld [vmem:[%s3] sm:$0xff]
  %v36 = vld [vmem:[%s3 + $0x8] sm:$0xff]
  %v37 = vld [vmem:[%s3 + $0x10] sm:$0xff]
  %v38 = vld [vmem:[%s3 + $0x18] sm:$0xff]
  %v39 = vld [vmem:[%s4] sm:$0x1]
  %v40 = vld [vmem:[%s5] sm:$0xff]
  %v41 = vld [vmem:[%s5 + $0x8] sm:$0xff]
  %v42 = vld [vmem:[%s6] sm:$0x1]
  %v43 = vld [vmem:[%s0] sm:$0xff]
  %v45 = vlaneseq
  %v46 = vshrl.u32 %v45, 7
  %v47 = vsub.s32 0, %v46
  %v48 = vrot.slane %v34, %v47
  %vm50 = vcmask 523264
  %v52 = vsel %vm50, %v43, 0
  %54 = vmatprep.subr.mxu0 0.0
  %55 = vmatpush1.msra.mxu0 %v26
  %56 = vmatprep.subr.mxu0 0.0
  %57 = vmatpush1.msra.mxu0 %v27
  %58 = vmatprep.subr.mxu0 0.0
  %59 = vmatpush1.msra.mxu0 %v28
  %60 = vmatprep.subr.mxu0 0.0
  %61 = vmatpush1.msra.mxu0 %v29
  %62 = vmatprep.subr.mxu0 0.0
  %63 = vmatpush1.msra.mxu0 %v30
  %64 = vmatprep.subr.mxu0 0.0
  %65 = vmatpush1.msra.mxu0 %v31
  %66 = vmatprep.subr.mxu0 0.0
  %67 = vmatpush1.msra.mxu0 %v32
  %68 = vmatprep.subr.mxu0 0.0
  %69 = vmatpush1.msra.mxu0 %v33
  %70 = vmatprep.subr.mxu0 0.0
  %71 = vmatpush1.msra.mxu0 0.0
  %72 = vmatprep.subr.mxu0 0.0
  %73 = vmatpush1.msra.mxu0 0.0
  %74 = vmatprep.subr.mxu0 0.0
  %75 = vmatpush1.msra.mxu0 0.0
  %76 = vmatprep.subr.mxu0 0.0
  %77 = vmatpush1.msra.mxu0 0.0
  %78 = vmatprep.subr.mxu0 0.0
  %79 = vmatpush1.msra.mxu0 0.0
  %80 = vmatprep.subr.mxu0 0.0
  %81 = vmatpush1.msra.mxu0 0.0
  %82 = vmatprep.subr.mxu0 0.0
  %83 = vmatpush1.msra.mxu0 0.0
  %84 = vmatprep.subr.mxu0 0.0
  %85 = vmatpush1.msra.mxu0 0.0
  %86 = vmatprep.subr.mxu0 0.0
  %87 = vmatpush1.msra.mxu0 0.0
  %88 = vmatprep.subr.mxu0 0.0
  %89 = vmatpush1.msra.mxu0 0.0
  %90 = vmatprep.subr.mxu0 0.0
  %91 = vmatpush1.msra.mxu0 0.0
  %92 = vmatprep.subr.mxu0 0.0
  %93 = vmatpush1.msra.mxu0 0.0
  %94 = vmatprep.subr.mxu0 0.0
  %95 = vmatpush1.msra.mxu0 0.0
  %96 = vmatprep.subr.mxu0 0.0
  %97 = vmatpush1.msra.mxu0 0.0
  %98 = vmatprep.subr.mxu0 0.0
  %99 = vmatpush1.msra.mxu0 0.0
  %100 = vmatprep.subr.mxu0 0.0
  %101 = vmatpush1.msra.mxu0 0.0
  %102 = vmatprep.subr.mxu0 0.0
  %103 = vmatpush1.msra.mxu0 0.0
  %104 = vmatprep.subr.mxu0 0.0
  %105 = vmatpush1.msra.mxu0 0.0
  %106 = vmatprep.subr.mxu0 0.0
  %107 = vmatpush1.msra.mxu0 0.0
  %108 = vmatprep.subr.mxu0 0.0
  %109 = vmatpush1.msra.mxu0 0.0
  %110 = vmatprep.subr.mxu0 0.0
  %111 = vmatpush1.msra.mxu0 0.0
  %112 = vmatprep.subr.mxu0 0.0
  %113 = vmatpush1.msra.mxu0 0.0
  %114 = vmatprep.subr.mxu0 0.0
  %115 = vmatpush1.msra.mxu0 0.0
  %116 = vmatprep.subr.mxu0 0.0
  %117 = vmatpush1.msra.mxu0 0.0
  %118 = vmatprep.mubr.f32.mxu0 0.0
  %119 = vmatmul.mubr.f32.gmra.mrb[0].mxu0 %v52
  %v120 = vpop.f32.mrb[0].mxu0
  %v121 = vadd.f32 %v48, %v120
  %v122 = vpop.f32.mrb[0].mxu0
  %123 = vdwg.mxu0
  %v124 = vmax.f32 %v121, 0.0
  %v126 = vlaneseq
  %v127 = vshrl.u32 %v126, 7
  %v128 = vsub.s32 0, %v127
  %v129 = vrot.slane %v39, %v128
  %vm131 = vcmask 261120
  %v133 = vsel %vm131, %v124, 0
  %135 = vmatprep.subr.mxu0 0.0
  %136 = vmatpush1.msra.mxu0 %v35
  %137 = vmatprep.subr.mxu0 0.0
  %138 = vmatpush1.msra.mxu0 %v36
  %139 = vmatprep.subr.mxu0 0.0
  %140 = vmatpush1.msra.mxu0 %v37
  %141 = vmatprep.subr.mxu0 0.0
  %142 = vmatpush1.msra.mxu0 %v38
  %143 = vmatprep.subr.mxu0 0.0
  %144 = vmatpush1.msra.mxu0 0.0
  %145 = vmatprep.subr.mxu0 0.0
  %146 = vmatpush1.msra.mxu0 0.0
  %147 = vmatprep.subr.mxu0 0.0
  %148 = vmatpush1.msra.mxu0 0.0
  %149 = vmatprep.subr.mxu0 0.0
  %150 = vmatpush1.msra.mxu0 0.0
  %151 = vmatprep.subr.mxu0 0.0
  %152 = vmatpush1.msra.mxu0 0.0
  %153 = vmatprep.subr.mxu0 0.0
  %154 = vmatpush1.msra.mxu0 0.0
  %155 = vmatprep.subr.mxu0 0.0
  %156 = vmatpush1.msra.mxu0 0.0
  %157 = vmatprep.subr.mxu0 0.0
  %158 = vmatpush1.msra.mxu0 0.0
  %159 = vmatprep.subr.mxu0 0.0
  %160 = vmatpush1.msra.mxu0 0.0
  %161 = vmatprep.subr.mxu0 0.0
  %162 = vmatpush1.msra.mxu0 0.0
  %163 = vmatprep.subr.mxu0 0.0
  %164 = vmatpush1.msra.mxu0 0.0
  %165 = vmatprep.subr.mxu0 0.0
  %166 = vmatpush1.msra.mxu0 0.0
  %167 = vmatprep.subr.mxu0 0.0
  %168 = vmatpush1.msra.mxu0 0.0
  %169 = vmatprep.subr.mxu0 0.0
  %170 = vmatpush1.msra.mxu0 0.0
  %171 = vmatprep.subr.mxu0 0.0
  %172 = vmatpush1.msra.mxu0 0.0
  %173 = vmatprep.subr.mxu0 0.0
  %174 = vmatpush1.msra.mxu0 0.0
  %175 = vmatprep.subr.mxu0 0.0
  %176 = vmatpush1.msra.mxu0 0.0
  %177 = vmatprep.subr.mxu0 0.0
  %178 = vmatpush1.msra.mxu0 0.0
  %179 = vmatprep.subr.mxu0 0.0
  %180 = vmatpush1.msra.mxu0 0.0
  %181 = vmatprep.subr.mxu0 0.0
  %182 = vmatpush1.msra.mxu0 0.0
  %183 = vmatprep.subr.mxu0 0.0
  %184 = vmatpush1.msra.mxu0 0.0
  %185 = vmatprep.subr.mxu0 0.0
  %186 = vmatpush1.msra.mxu0 0.0
  %187 = vmatprep.subr.mxu0 0.0
  %188 = vmatpush1.msra.mxu0 0.0
  %189 = vmatprep.subr.mxu0 0.0
  %190 = vmatpush1.msra.mxu0 0.0
  %191 = vmatprep.subr.mxu0 0.0
  %192 = vmatpush1.msra.mxu0 0.0
  %193 = vmatprep.subr.mxu0 0.0
  %194 = vmatpush1.msra.mxu0 0.0
  %195 = vmatprep.subr.mxu0 0.0
  %196 = vmatpush1.msra.mxu0 0.0
  %197 = vmatprep.subr.mxu0 0.0
  %198 = vmatpush1.msra.mxu0 0.0
  %199 = vmatprep.mubr.f32.mxu0 0.0
  %200 = vmatmul.mubr.f32.gmra.mrb[0].mxu0 %v133
  %v201 = vpop.f32.mrb[0].mxu0
  %v202 = vadd.f32 %v129, %v201
  %v203 = vpop.f32.mrb[0].mxu0
  %204 = vdwg.mxu0
  %v205 = vmax.f32 %v202, 0.0
  %v207 = vlaneseq
  %v208 = vshrl.u32 %v207, 7
  %v209 = vsub.s32 0, %v208
  %v210 = vrot.slane %v42, %v209
  %vm212 = vcmask 130048
  %v214 = vsel %vm212, %v205, 0
  %216 = vmatprep.subr.mxu0 0.0
  %217 = vmatpush1.msra.mxu0 %v40
  %218 = vmatprep.subr.mxu0 0.0
  %219 = vmatpush1.msra.mxu0 %v41
  %220 = vmatprep.subr.mxu0 0.0
  %221 = vmatpush1.msra.mxu0 0.0
  %222 = vmatprep.subr.mxu0 0.0
  %223 = vmatpush1.msra.mxu0 0.0
  %224 = vmatprep.subr.mxu0 0.0
  %225 = vmatpush1.msra.mxu0 0.0
  %226 = vmatprep.subr.mxu0 0.0
  %227 = vmatpush1.msra.mxu0 0.0
  %228 = vmatprep.subr.mxu0 0.0
  %229 = vmatpush1.msra.mxu0 0.0
  %230 = vmatprep.subr.mxu0 0.0
  %231 = vmatpush1.msra.mxu0 0.0
  %232 = vmatprep.subr.mxu0 0.0
  %233 = vmatpush1.msra.mxu0 0.0
  %234 = vmatprep.subr.mxu0 0.0
  %235 = vmatpush1.msra.mxu0 0.0
  %236 = vmatprep.subr.mxu0 0.0
  %237 = vmatpush1.msra.mxu0 0.0
  %238 = vmatprep.subr.mxu0 0.0
  %239 = vmatpush1.msra.mxu0 0.0
  %240 = vmatprep.subr.mxu0 0.0
  %241 = vmatpush1.msra.mxu0 0.0
  %242 = vmatprep.subr.mxu0 0.0
  %243 = vmatpush1.msra.mxu0 0.0
  %244 = vmatprep.subr.mxu0 0.0
  %245 = vmatpush1.msra.mxu0 0.0
  %246 = vmatprep.subr.mxu0 0.0
  %247 = vmatpush1.msra.mxu0 0.0
  %248 = vmatprep.subr.mxu0 0.0
  %249 = vmatpush1.msra.mxu0 0.0
  %250 = vmatprep.subr.mxu0 0.0
  %251 = vmatpush1.msra.mxu0 0.0
  %252 = vmatprep.subr.mxu0 0.0
  %253 = vmatpush1.msra.mxu0 0.0
  %254 = vmatprep.subr.mxu0 0.0
  %255 = vmatpush1.msra.mxu0 0.0
  %256 = vmatprep.subr.mxu0 0.0
  %257 = vmatpush1.msra.mxu0 0.0
  %258 = vmatprep.subr.mxu0 0.0
  %259 = vmatpush1.msra.mxu0 0.0
  %260 = vmatprep.subr.mxu0 0.0
  %261 = vmatpush1.msra.mxu0 0.0
  %262 = vmatprep.subr.mxu0 0.0
  %263 = vmatpush1.msra.mxu0 0.0
  %264 = vmatprep.subr.mxu0 0.0
  %265 = vmatpush1.msra.mxu0 0.0
  %266 = vmatprep.subr.mxu0 0.0
  %267 = vmatpush1.msra.mxu0 0.0
  %268 = vmatprep.subr.mxu0 0.0
  %269 = vmatpush1.msra.mxu0 0.0
  %270 = vmatprep.subr.mxu0 0.0
  %271 = vmatpush1.msra.mxu0 0.0
  %272 = vmatprep.subr.mxu0 0.0
  %273 = vmatpush1.msra.mxu0 0.0
  %274 = vmatprep.subr.mxu0 0.0
  %275 = vmatpush1.msra.mxu0 0.0
  %276 = vmatprep.subr.mxu0 0.0
  %277 = vmatpush1.msra.mxu0 0.0
  %278 = vmatprep.subr.mxu0 0.0
  %279 = vmatpush1.msra.mxu0 0.0
  %280 = vmatprep.mubr.f32.mxu0 0.0
  %281 = vmatmul.mubr.f32.gmra.mrb[0].mxu0 %v214
  %v282 = vpop.f32.mrb[0].mxu0
  %v283 = vadd.f32 %v210, %v282
  %v284 = vpop.f32.mrb[0].mxu0
  %285 = vdwg.mxu0
  %v286 = vmax.f32 %v283, 0.0
  %vm287 = vcmask 15360
  %288 = vst.msk [vmem:[%s7] sm:$0xff] %vm287, %v286
  // Predicated region
  $region30: #{tpu_custom_call.1} parent=0 // pred_check
    _
  $region31: #{tpu_custom_call.1} parent=0 // pred_check_branch
    %290 = sbr.rel (0) target = $region33
  $region32: #{tpu_custom_call.1} parent=0 // pred_region
    _
  $region33: #{tpu_custom_call.1} parent=0 // pred_fallthru
    _
  // Predicated region
  $region34: #{tpu_custom_call.1} parent=0 // pred_check
    _
  $region35: #{tpu_custom_call.1} parent=0 // pred_check_branch
    %292 = sbr.rel (0) target = $region37
  $region36: #{tpu_custom_call.1} parent=0 // pred_region
    _
  $region37: #{tpu_custom_call.1} parent=0 // pred_fallthru
    _

</llo_original>
